<compile_context>
chip_gen: v7x
topology: tpu7x:2x2x1
jax: 0.10.0
libtpu: 0.0.40
codegen_flags: <defaults>
</compile_context>

<pallas_src>
import jax
import jax.numpy as jnp
from jax.experimental import pallas as pl
from jax.experimental.pallas import tpu as pltpu

_MIB = 1024 * 1024


# ---------------------------------------------------------------------------
# Kernel
# ---------------------------------------------------------------------------
def _pos_embed_kernel(colT_ref, row_ref, out_ref):
    # colT_ref: (F, W)      col_embed.weight[:W].T         (same for every block)
    # row_ref : (Ht, F)     row_embed.weight[h*Ht:(h+1)*Ht] (this block's rows)
    # out_ref : (2F, Ht*W)  lane-dense flattened output block:
    #     out[f,     y*W + x] = colT_ref[f, x]
    #     out[F + f, y*W + x] = row_ref[y, f]
    F, W = colT_ref.shape
    Ht = row_ref.shape[0]
    HW = Ht * W

    # Column half: pure lane-block copies -- index k = y*W + x picks
    # colT[f, k % W] = colT[f, x].  No one-hot temporary, no extra MXU pass.
    col_half = jnp.tile(colT_ref[...].astype(jnp.float32), (1, Ht))          # (F, HW)

    # Row half: genuinely lane-expanding; exact one-hot gather-as-matmul on the
    # otherwise-idle MXU.  Contract over LHS dim 0 so no XLU transpose is
    # needed on the row table.  0/1 operands + f32 accumulation -> exact.
    k_r = jax.lax.broadcasted_iota(jnp.int32, (Ht, HW), 1)
    y_r = jax.lax.broadcasted_iota(jnp.int32, (Ht, HW), 0)
    row_onehot = ((k_r >= y_r * W) & (k_r < (y_r + 1) * W)).astype(jnp.float32)  # (Ht, HW)
    row_half = jax.lax.dot_general(
        row_ref[...].astype(jnp.float32), row_onehot,
        dimension_numbers=(((0,), (0,)), ((), ())),
        preferred_element_type=jnp.float32)                                   # (F, HW)

    # Two direct stores; no concatenated (2F, HW) temporary.
    out_ref[:F, :] = col_half.astype(out_ref.dtype)
    out_ref[F:, :] = row_half.astype(out_ref.dtype)


# ---------------------------------------------------------------------------
# Tiling / VMEM sizing helpers
# ---------------------------------------------------------------------------
def _vmem_capacity_bytes():
    try:
        return int(pltpu.get_tpu_info().vmem_capacity_bytes)
    except Exception:
        return 64 * _MIB  # conservative (v7x-sized) default if the query fails


def _block_footprint_bytes(ht, W, F, itemsize):
    """Per-grid-step VMEM footprint, *including* in-kernel temporaries."""
    out_b = 2 * (2 * F) * ht * W * itemsize            # double-buffered output block
    in_b = 2 * (F * W + ht * F) * itemsize             # double-buffered input blocks
    tmp_b = (3 * ht * ht * W + 2 * F * ht * W) * 4     # iotas + one-hot + f32 halves
    return out_b + in_b + tmp_b


def _choose_row_tiling(H, W, F, itemsize, footprint_budget):
    """Pick (H_pad, Ht): row-tile size Ht over (possibly zero-padded) H_pad rows.

    Either Ht == H_pad == H (single full block -> no (8,128) constraint), or
    Ht % 8 == 0 and (Ht*W) % 128 == 0 so every tiled block is store/DMA dense.
    When tiling, prefer an even number of blocks (keeps both v7x TensorCores
    busy under the "parallel" grid axis; harmless on v5e/v6e).
    """
    if _block_footprint_bytes(H, W, F, itemsize) <= footprint_budget:
        return H, H

    legal = [ht for ht in range(8, H, 8) if (ht * W) % 128 == 0]
    if not legal:
        return H, H  # no dense tile exists; fall back to one full block

    fitting = [ht for ht in legal
               if _block_footprint_bytes(ht, W, F, itemsize) <= footprint_budget]
    if not fitting:
        fitting = [legal[0]]  # smallest legal tile; vmem_limit is sized to it below

    even = [ht for ht in fitting if (-(-H // ht)) % 2 == 0]
    ht = max(even) if even else max(fitting)
    h_pad = -(-H // ht) * ht
    return h_pad, ht


# ---------------------------------------------------------------------------
# Wrappers
# ---------------------------------------------------------------------------
def compute_position_slab(col_weight, row_weight, H, W, out_dtype=None):
    """(2F, H, W) positional slab.  Depends only on the weights and (H, W).

    PERF: the result is batch-invariant and weight-determined -- hoist/cache it
    across forward passes at the call site; for the default 16x16x64 map the
    pallas_call launch cost exceeds the ~128 KiB of useful HBM traffic.
    PERF: pass out_dtype=jnp.bfloat16 (the activation dtype) to halve the HBM
    writeback of this store-bound kernel; accumulation is f32 regardless.
    """
    n_pos_x, F = int(col_weight.shape[0]), int(col_weight.shape[1])
    n_pos_y, F_row = int(row_weight.shape[0]), int(row_weight.shape[1])
    if F != F_row:
        raise ValueError("col/row embedding feature dims differ")
    # nn.Embedding would raise an index error here; do not silently truncate.
    if W > n_pos_x or H > n_pos_y:
        raise ValueError(
            f"spatial size ({H}, {W}) exceeds embedding tables ({n_pos_y}, {n_pos_x})")

    if out_dtype is None:
        out_dtype = col_weight.dtype
    itemsize = jnp.dtype(out_dtype).itemsize

    vmem_cap = _vmem_capacity_bytes()
    small_vmem = vmem_cap <= 64 * _MIB                 # v7x-class parts
    footprint_budget = (24 if small_vmem else 48) * _MIB
    H_pad, Ht = _choose_row_tiling(H, W, F, itemsize, footprint_budget)
    n_blocks = H_pad // Ht

    # Cap vmem_limit well below physical (headroom for compiler scratch), but
    # always large enough for this configuration's footprint.
    footprint = _block_footprint_bytes(Ht, W, F, itemsize)
    cap = (48 if small_vmem else 96) * _MIB
    vmem_limit = int(min(cap, max(32 * _MIB, footprint + 4 * _MIB)))

    # Tiny XLA-side prep: identity gathers at arange indices are plain slices;
    # pre-transpose the col table so the kernel needs no XLU transpose.
    col_t = col_weight[:W].T                           # (F, W)
    row_w = row_weight[:H]                             # (H, F)
    if H_pad > H:
        row_w = jnp.pad(row_w, ((0, H_pad - H), (0, 0)))

    pos_flat = pl.pallas_call(
        _pos_embed_kernel,
        grid=(n_blocks,),
        in_specs=[
            # Full col table; constant index_map -> not re-DMA'd across the grid.
            pl.BlockSpec((F, W), lambda h: (0, 0)),
            # One Ht-row slice of the row table per step.
            pl.BlockSpec((Ht, F), lambda h: (h, 0)),
        ],
        out_specs=pl.BlockSpec((2 * F, Ht * W), lambda h: (0, h)),
        out_shape=jax.ShapeDtypeStruct((2 * F, H_pad * W), out_dtype),
        compiler_params=pltpu.CompilerParams(
            dimension_semantics=("parallel",),   # v7x: two TCs split the blocks
            vmem_limit_bytes=vmem_limit,
        ),
    )(col_t, row_w)

    if H_pad > H:
        pos_flat = pos_flat[:, : H * W]
    # Contiguous metadata reshape back to (2F, H, W).
    return pos_flat.reshape(2 * F, H, W)


def position_embedding_learned(x, col_weight, row_weight, out_dtype=None):
    """Forward of PositionEmbeddingLearned.

    x:          (B, C, H, W) NCHW feature map (only B, H, W are consumed)
    col_weight: (n_pos_x, F) = col_embed.weight
    row_weight: (n_pos_y, F) = row_embed.weight
    returns:    (B, 2F, H, W)
    """
    B = int(x.shape[0])
    H, W = int(x.shape[-2]), int(x.shape[-1])
    pos = compute_position_slab(col_weight, row_weight, H, W, out_dtype)
    # Lazy batch repeat: keep as a broadcast so the slab is written once and the
    # downstream add fuses it instead of materializing B HBM copies.
    return jnp.broadcast_to(pos[None], (B,) + pos.shape)


if __name__ == "__main__":
    # Module defaults: n_pos_x = n_pos_y = 16, num_pos_feats = 64.
    n_pos_x, n_pos_y, num_pos_feats = 16, 16, 64

    key = jax.random.PRNGKey(0)
    k_x, k_row, k_col = jax.random.split(key, 3)

    # Deterministic stand-ins for nn.init.uniform_ (uniform in [0, 1)).
    row_embed = jax.random.uniform(k_row, (n_pos_y, num_pos_feats), dtype=jnp.float32)
    col_embed = jax.random.uniform(k_col, (n_pos_x, num_pos_feats), dtype=jnp.float32)

    # Small NCHW input; only (B, H, W) matter for this forward.
    x = jax.random.normal(k_x, (2, 4, 16, 16), dtype=jnp.float32)

    out = jax.block_until_ready(position_embedding_learned(x, col_embed, row_embed))

    # Pure-JAX reference with the exact PyTorch semantics.
    B, _, H, W = x.shape
    F = num_pos_feats
    x_emb = col_embed[:W]                                    # (W, F)
    y_emb = row_embed[:H]                                    # (H, F)
    ref_pos = jnp.concatenate(
        [jnp.broadcast_to(x_emb[None, :, :], (H, W, F)),
         jnp.broadcast_to(y_emb[:, None, :], (H, W, F))],
        axis=-1,
    ).transpose(2, 0, 1)                                     # (2F, H, W)
    ref = jnp.broadcast_to(ref_pos[None], (B, 2 * F, H, W))

    assert out.shape == (B, 2 * F, H, W), out.shape
    # tile + one-hot f32 matmul are exact; tight tolerance still catches any
    # indexing/layout bug (wrong values would differ by O(0.3)).
    err = float(jnp.max(jnp.abs(out - ref)))
    assert err < 1e-5, f"Pallas output mismatch vs reference (max abs err {err})"

    print("KERNEL_OK")
</pallas_src>

<mosaic_0001>
module attributes {stable_mosaic.version = 11 : i64} {
  func.func @_pos_embed_kernel(%arg0: i32, %arg1: memref<64x16xf32, #tpu.memory_space<vmem>>, %arg2: memref<16x64xf32, #tpu.memory_space<vmem>>, %arg3: memref<128x256xf32, #tpu.memory_space<vmem>>) attributes {dimension_semantics = [#tpu.dimension_semantics<parallel>], iteration_bounds = array<i64: 1>, scalar_prefetch = 0 : i64, scratch_operands = 0 : i64, tpu.core_type = #tpu.core_type<tc>, window_params = [{pipeline_mode = #tpu.pipeline_mode<synchronous>, transform_indices = @transform_0, window_bounds = array<i64: 64, 16>}, {transform_indices = @transform_1, window_bounds = array<i64: 16, 64>}, {transform_indices = @transform_2, window_bounds = array<i64: 128, 256>}]} {
    %c0 = arith.constant 0 : index
    %c0_0 = arith.constant 0 : index
    %0 = vector.load %arg1[%c0, %c0_0] : memref<64x16xf32, #tpu.memory_space<vmem>>, vector<64x16xf32>
    %1 = tpu.concatenate %0, %0, %0, %0, %0, %0, %0, %0, %0, %0, %0, %0, %0, %0, %0, %0 in 1 : vector<64x16xf32>, vector<64x16xf32>, vector<64x16xf32>, vector<64x16xf32>, vector<64x16xf32>, vector<64x16xf32>, vector<64x16xf32>, vector<64x16xf32>, vector<64x16xf32>, vector<64x16xf32>, vector<64x16xf32>, vector<64x16xf32>, vector<64x16xf32>, vector<64x16xf32>, vector<64x16xf32>, vector<64x16xf32> -> vector<64x256xf32>
    %2 = tpu.iota {dimensions = array<i32: 1>} : vector<16x256xi32>
    %3 = tpu.iota {dimensions = array<i32: 0>} : vector<16x256xi32>
    %c16_i32 = arith.constant 16 : i32
    %4 = vector.broadcast %c16_i32 : i32 to vector<16x256xi32>
    %5 = arith.muli %3, %4 : vector<16x256xi32>
    %6 = arith.cmpi sge, %2, %5 : vector<16x256xi32>
    %c1_i32 = arith.constant 1 : i32
    %7 = vector.broadcast %c1_i32 : i32 to vector<16x256xi32>
    %8 = arith.addi %3, %7 : vector<16x256xi32>
    %c16_i32_1 = arith.constant 16 : i32
    %9 = vector.broadcast %c16_i32_1 : i32 to vector<16x256xi32>
    %10 = arith.muli %8, %9 : vector<16x256xi32>
    %11 = arith.cmpi slt, %2, %10 : vector<16x256xi32>
    %12 = arith.andi %6, %11 : vector<16x256xi1>
    %13 = arith.extui %12 : vector<16x256xi1> to vector<16x256xi32>
    %14 = arith.sitofp %13 : vector<16x256xi32> to vector<16x256xf32>
    %c0_2 = arith.constant 0 : index
    %c0_3 = arith.constant 0 : index
    %15 = vector.load %arg2[%c0_2, %c0_3] : memref<16x64xf32, #tpu.memory_space<vmem>>, vector<16x64xf32>
    %cst = arith.constant dense<0.000000e+00> : vector<64x256xf32>
    %16 = tpu.matmul %15, %14, %cst {dimension_numbers = #tpu.dot_dimension_numbers<[0], [0], [1], [1], [0, 1, 1, 1], [], []>} : vector<16x64xf32>, vector<16x256xf32>, vector<64x256xf32> -> vector<64x256xf32>
    %c0_4 = arith.constant 0 : index
    %c0_5 = arith.constant 0 : index
    %17 = vector.load %arg3[%c0_4, %c0_5] : memref<128x256xf32, #tpu.memory_space<vmem>>, vector<64x256xf32>
    tpu.vector_store %arg3[%c0_4, %c0_5], %1 {strides = array<i32>} : memref<128x256xf32, #tpu.memory_space<vmem>>, vector<64x256xf32>,
    %c64 = arith.constant 64 : index
    %c0_6 = arith.constant 0 : index
    %18 = vector.load %arg3[%c64, %c0_6] : memref<128x256xf32, #tpu.memory_space<vmem>>, vector<64x256xf32>
    tpu.vector_store %arg3[%c64, %c0_6], %16 {strides = array<i32>} : memref<128x256xf32, #tpu.memory_space<vmem>>, vector<64x256xf32>,
    return
  }
  func.func @transform_0(%arg0: i32) -> (i32, i32) {
    %c0_i32 = arith.constant 0 : i32
    %c0_i32_0 = arith.constant 0 : i32
    %c0_i32_1 = arith.constant 0 : i32
    return %c0_i32, %c0_i32_0 : i32, i32
  }
  func.func @transform_1(%arg0: i32) -> (i32, i32) {
    %c0_i32 = arith.constant 0 : i32
    %c0_i32_0 = arith.constant 0 : i32
    return %arg0, %c0_i32 : i32, i32
  }
  func.func @transform_2(%arg0: i32) -> (i32, i32) {
    %c0_i32 = arith.constant 0 : i32
    %c0_i32_0 = arith.constant 0 : i32
    return %c0_i32, %arg0 : i32, i32
  }
}

</mosaic_0001>

<llo_original>
// kernel: tpu_custom_call.1
$region0: #{tpu_custom_call.1}
  #allocation0 [shape = 'u32[]', space=smem, size = 0x4, offset = 0x4, fixed_abs, tag = 'smem constant byte address 0x4 - core index']
  #allocation1 [shape = 'u32[144,128]{1,0:T(1,128)}', space=vmem, size = 0x12000, scoped, tag = 'internal scratch']
  %s0 = inlined_call_operand.vmem [shape: f32[64,16], index: 0, kind: input, shape index: {}]
  %s1 = inlined_call_operand.vmem [shape: f32[16,64], index: 1, kind: input, shape index: {}]
  %s2 = inlined_call_operand.hbm [shape: f32[128,256], index: 2, kind: output, shape index: {}]
  %s3 = sld [smem:[#allocation0]]
  $region18: #{tpu_custom_call.1} parent=0
    _
  %s5 = ssub.s32 1, %s3
  %s6 = scalar_select 0, %s5, %s3
  $region1: #{tpu_custom_call.1} parent=0
    #allocation2 [shape = 'u8[131072]{0}', space=vmem, size = 0x20000, scoped, tag = 'output window, operand 0, single buffered']
    #allocation3 [shape = 's32[1]{0}', space=sflag, size = 0x4, scoped, tag = 'scoped memory for tpu_custom_call.1']
    %7 = vsyncpa [#allocation3], 0
    // Predicated region
    $region2: #{tpu_custom_call.1} parent=1 // pred_check
      _
    $region3: #{tpu_custom_call.1} parent=1 // pred_check_branch
      %9 = sbr.rel (0) target = $region5
    $region4: #{tpu_custom_call.1} parent=1 // pred_region
      _
    $region5: #{tpu_custom_call.1} parent=1 // pred_fallthru
      _
    // Predicated region
    $region6: #{tpu_custom_call.1} parent=1 // pred_check
      _
    $region7: #{tpu_custom_call.1} parent=1 // pred_check_branch
      %11 = sbr.rel (0) target = $region9
    $region8: #{tpu_custom_call.1} parent=1 // pred_region
      _
    $region9: #{tpu_custom_call.1} parent=1 // pred_fallthru
      _
    %v12 = vld [vmem:[%s0] sm:$0xff]
    %v13 = vld [vmem:[%s0 + $0x8] sm:$0xff]
    %v14 = vld [vmem:[%s0 + $0x10] sm:$0xff]
    %v15 = vld [vmem:[%s0 + $0x18] sm:$0xff]
    %v16 = vld [vmem:[%s0 + $0x20] sm:$0xff]
    %v17 = vld [vmem:[%s0 + $0x28] sm:$0xff]
    %v18 = vld [vmem:[%s0 + $0x30] sm:$0xff]
    %v19 = vld [vmem:[%s0 + $0x38] sm:$0xff]
    %28 = vrot.lane.b32.xlu0 %v12, 16
    %v29 = vpop.permute.xlu0 %28
    %30 = vrot.lane.b32.xlu0 %v13, 16
    %v31 = vpop.permute.xlu0 %30
    %32 = vrot.lane.b32.xlu0 %v14, 16
    %v33 = vpop.permute.xlu0 %32
    %34 = vrot.lane.b32.xlu0 %v15, 16
    %v35 = vpop.permute.xlu0 %34
    %36 = vrot.lane.b32.xlu0 %v16, 16
    %v37 = vpop.permute.xlu0 %36
    %38 = vrot.lane.b32.xlu0 %v17, 16
    %v39 = vpop.permute.xlu0 %38
    %40 = vrot.lane.b32.xlu0 %v18, 16
    %v41 = vpop.permute.xlu0 %40
    %42 = vrot.lane.b32.xlu0 %v19, 16
    %v43 = vpop.permute.xlu0 %42
    %52 = vrot.lane.b32.xlu0 %v12, 32
    %v53 = vpop.permute.xlu0 %52
    %54 = vrot.lane.b32.xlu0 %v13, 32
    %v55 = vpop.permute.xlu0 %54
    %56 = vrot.lane.b32.xlu0 %v14, 32
    %v57 = vpop.permute.xlu0 %56
    %58 = vrot.lane.b32.xlu0 %v15, 32
    %v59 = vpop.permute.xlu0 %58
    %60 = vrot.lane.b32.xlu0 %v16, 32
    %v61 = vpop.permute.xlu0 %60
    %62 = vrot.lane.b32.xlu0 %v17, 32
    %v63 = vpop.permute.xlu0 %62
    %64 = vrot.lane.b32.xlu0 %v18, 32
    %v65 = vpop.permute.xlu0 %64
    %66 = vrot.lane.b32.xlu0 %v19, 32
    %v67 = vpop.permute.xlu0 %66
    %76 = vrot.lane.b32.xlu0 %v12, 48
    %v77 = vpop.permute.xlu0 %76
    %78 = vrot.lane.b32.xlu0 %v13, 48
    %v79 = vpop.permute.xlu0 %78
    %80 = vrot.lane.b32.xlu0 %v14, 48
    %v81 = vpop.permute.xlu0 %80
    %82 = vrot.lane.b32.xlu0 %v15, 48
    %v83 = vpop.permute.xlu0 %82
    %84 = vrot.lane.b32.xlu0 %v16, 48
    %v85 = vpop.permute.xlu0 %84
    %86 = vrot.lane.b32.xlu0 %v17, 48
    %v87 = vpop.permute.xlu0 %86
    %88 = vrot.lane.b32.xlu0 %v18, 48
    %v89 = vpop.permute.xlu0 %88
    %90 = vrot.lane.b32.xlu0 %v19, 48
    %v91 = vpop.permute.xlu0 %90
    %100 = vrot.lane.b32.xlu0 %v12, 64
    %v101 = vpop.permute.xlu0 %100
    %102 = vrot.lane.b32.xlu0 %v13, 64
    %v103 = vpop.permute.xlu0 %102
    %104 = vrot.lane.b32.xlu0 %v14, 64
    %v105 = vpop.permute.xlu0 %104
    %106 = vrot.lane.b32.xlu0 %v15, 64
    %v107 = vpop.permute.xlu0 %106
    %108 = vrot.lane.b32.xlu0 %v16, 64
    %v109 = vpop.permute.xlu0 %108
    %110 = vrot.lane.b32.xlu0 %v17, 64
    %v111 = vpop.permute.xlu0 %110
    %112 = vrot.lane.b32.xlu0 %v18, 64
    %v113 = vpop.permute.xlu0 %112
    %114 = vrot.lane.b32.xlu0 %v19, 64
    %v115 = vpop.permute.xlu0 %114
    %124 = vrot.lane.b32.xlu0 %v12, 80
    %v125 = vpop.permute.xlu0 %124
    %126 = vrot.lane.b32.xlu0 %v13, 80
    %v127 = vpop.permute.xlu0 %126
    %128 = vrot.lane.b32.xlu0 %v14, 80
    %v129 = vpop.permute.xlu0 %128
    %130 = vrot.lane.b32.xlu0 %v15, 80
    %v131 = vpop.permute.xlu0 %130
    %132 = vrot.lane.b32.xlu0 %v16, 80
    %v133 = vpop.permute.xlu0 %132
    %134 = vrot.lane.b32.xlu0 %v17, 80
    %v135 = vpop.permute.xlu0 %134
    %136 = vrot.lane.b32.xlu0 %v18, 80
    %v137 = vpop.permute.xlu0 %136
    %138 = vrot.lane.b32.xlu0 %v19, 80
    %v139 = vpop.permute.xlu0 %138
    %148 = vrot.lane.b32.xlu0 %v12, 96
    %v149 = vpop.permute.xlu0 %148
    %150 = vrot.lane.b32.xlu0 %v13, 96
    %v151 = vpop.permute.xlu0 %150
    %152 = vrot.lane.b32.xlu0 %v14, 96
    %v153 = vpop.permute.xlu0 %152
    %154 = vrot.lane.b32.xlu0 %v15, 96
    %v155 = vpop.permute.xlu0 %154
    %156 = vrot.lane.b32.xlu0 %v16, 96
    %v157 = vpop.permute.xlu0 %156
    %158 = vrot.lane.b32.xlu0 %v17, 96
    %v159 = vpop.permute.xlu0 %158
    %160 = vrot.lane.b32.xlu0 %v18, 96
    %v161 = vpop.permute.xlu0 %160
    %162 = vrot.lane.b32.xlu0 %v19, 96
    %v163 = vpop.permute.xlu0 %162
    %172 = vrot.lane.b32.xlu0 %v12, 112
    %v173 = vpop.permute.xlu0 %172
    %174 = vrot.lane.b32.xlu0 %v13, 112
    %v175 = vpop.permute.xlu0 %174
    %176 = vrot.lane.b32.xlu0 %v14, 112
    %v177 = vpop.permute.xlu0 %176
    %178 = vrot.lane.b32.xlu0 %v15, 112
    %v179 = vpop.permute.xlu0 %178
    %180 = vrot.lane.b32.xlu0 %v16, 112
    %v181 = vpop.permute.xlu0 %180
    %182 = vrot.lane.b32.xlu0 %v17, 112
    %v183 = vpop.permute.xlu0 %182
    %184 = vrot.lane.b32.xlu0 %v18, 112
    %v185 = vpop.permute.xlu0 %184
    %186 = vrot.lane.b32.xlu0 %v19, 112
    %v187 = vpop.permute.xlu0 %186
    %vm196 = vcmask 130048
    %v197 = vsel %vm196, %v12, %v29
    %v198 = vsel %vm196, %v13, %v31
    %v199 = vsel %vm196, %v14, %v33
    %v200 = vsel %vm196, %v15, %v35
    %v201 = vsel %vm196, %v16, %v37
    %v202 = vsel %vm196, %v17, %v39
    %v203 = vsel %vm196, %v18, %v41
    %v204 = vsel %vm196, %v19, %v43
    %vm205 = vcmask 261120
    %v206 = vsel %vm205, %v197, %v53
    %v207 = vsel %vm205, %v198, %v55
    %v208 = vsel %vm205, %v199, %v57
    %v209 = vsel %vm205, %v200, %v59
    %v210 = vsel %vm205, %v201, %v61
    %v211 = vsel %vm205, %v202, %v63
    %v212 = vsel %vm205, %v203, %v65
    %v213 = vsel %vm205, %v204, %v67
    %vm214 = vcmask 392192
    %v215 = vsel %vm214, %v206, %v77
    %v216 = vsel %vm214, %v207, %v79
    %v217 = vsel %vm214, %v208, %v81
    %v218 = vsel %vm214, %v209, %v83
    %v219 = vsel %vm214, %v210, %v85
    %v220 = vsel %vm214, %v211, %v87
    %v221 = vsel %vm214, %v212, %v89
    %v222 = vsel %vm214, %v213, %v91
    %vm223 = vcmask 523264
    %v224 = vsel %vm223, %v215, %v101
    %v225 = vsel %vm223, %v216, %v103
    %v226 = vsel %vm223, %v217, %v105
    %v227 = vsel %vm223, %v218, %v107
    %v228 = vsel %vm223, %v219, %v109
    %v229 = vsel %vm223, %v220, %v111
    %v230 = vsel %vm223, %v221, %v113
    %v231 = vsel %vm223, %v222, %v115
    %vm232 = vcmask 654336
    %v233 = vsel %vm232, %v224, %v125
    %v234 = vsel %vm232, %v225, %v127
    %v235 = vsel %vm232, %v226, %v129
    %v236 = vsel %vm232, %v227, %v131
    %v237 = vsel %vm232, %v228, %v133
    %v238 = vsel %vm232, %v229, %v135
    %v239 = vsel %vm232, %v230, %v137
    %v240 = vsel %vm232, %v231, %v139
    %vm241 = vcmask 785408
    %v242 = vsel %vm241, %v233, %v149
    %v243 = vsel %vm241, %v234, %v151
    %v244 = vsel %vm241, %v235, %v153
    %v245 = vsel %vm241, %v236, %v155
    %v246 = vsel %vm241, %v237, %v157
    %v247 = vsel %vm241, %v238, %v159
    %v248 = vsel %vm241, %v239, %v161
    %v249 = vsel %vm241, %v240, %v163
    %vm250 = vcmask 916480
    %v251 = vsel %vm250, %v242, %v173
    %v252 = vsel %vm250, %v243, %v175
    %v253 = vsel %vm250, %v244, %v177
    %v254 = vsel %vm250, %v245, %v179
    %v255 = vsel %vm250, %v246, %v181
    %v256 = vsel %vm250, %v247, %v183
    %v257 = vsel %vm250, %v248, %v185
    %v258 = vsel %vm250, %v249, %v187
    %v259 = vlaneseq
    %v260 = vand.u32 %v259, 127
    %v261 = vadd.s32 %v260, 128
    %v262 = vlaneseq
    %v263 = vshrl.u32 %v262, 7
    %v264 = vadd.s32 %v263, 8
    %v265 = vmul.u32 %v263, 16
    %v266 = vmul.u32 %v264, 16
    %vm267 = vcmp.ge.s32.totalorder %v260, %v265
    %vm268 = vcmp.ge.s32.totalorder %v261, %v265
    %vm269 = vcmp.ge.s32.totalorder %v260, %v266
    %vm270 = vcmp.ge.s32.totalorder %v261, %v266
    %v271 = vadd.s32 %v263, 1
    %v272 = vadd.s32 %v264, 1
    %v273 = vmul.u32 %v271, 16
    %v274 = vmul.u32 %v272, 16
    %vm275 = vcmp.lt.s32.totalorder %v260, %v273
    %vm276 = vcmp.lt.s32.totalorder %v261, %v273
    %vm277 = vcmp.lt.s32.totalorder %v260, %v274
    %vm278 = vcmp.lt.s32.totalorder %v261, %v274
    %vm279 = vmand %vm267, %vm275
    %vm280 = vmand %vm268, %vm276
    %vm281 = vmand %vm269, %vm277
    %vm282 = vmand %vm270, %vm278
    %v283 = vsel %vm279, 1, 0
    %v284 = vsel %vm280, 1, 0
    %v285 = vsel %vm281, 1, 0
    %v286 = vsel %vm282, 1, 0
    %v287 = vcvt.s32.f32 %v283
    %v288 = vcvt.s32.f32 %v284
    %v289 = vcvt.s32.f32 %v285
    %v290 = vcvt.s32.f32 %v286
    %v291 = vld [vmem:[%s1] sm:$0xff]
    %v292 = vld [vmem:[%s1 + $0x8] sm:$0xff]
    %293 = vxpose.xlu0.b32.start [1/16] %v291, 128
    %294 = vxpose.xlu0.b32.cont [2/16] %v292, 128
    %295 = vxpose.xlu0.b32.cont [3/16] 0.0, 128
    %296 = vxpose.xlu0.b32.cont [4/16] 0.0, 128
    %297 = vxpose.xlu0.b32.cont [5/16] 0.0, 128
    %298 = vxpose.xlu0.b32.cont [6/16] 0.0, 128
    %299 = vxpose.xlu0.b32.cont [7/16] 0.0, 128
    %300 = vxpose.xlu0.b32.cont [8/16] 0.0, 128
    %301 = vxpose.xlu0.b32.cont [9/16] 0.0, 128
    %302 = vxpose.xlu0.b32.cont [10/16] 0.0, 128
    %303 = vxpose.xlu0.b32.cont [11/16] 0.0, 128
    %304 = vxpose.xlu0.b32.cont [12/16] 0.0, 128
    %305 = vxpose.xlu0.b32.cont [13/16] 0.0, 128
    %306 = vxpose.xlu0.b32.cont [14/16] 0.0, 128
    %307 = vxpose.xlu0.b32.cont [15/16] 0.0, 128
    %308 = vxpose.xlu0.b32.end [16/16] 0.0, 128
    %v309 = vpop.trf.xlu0
    %v310 = vpop.trf.xlu0
    %v311 = vpop.trf.xlu0
    %v312 = vpop.trf.xlu0
    %v313 = vpop.trf.xlu0
    %v314 = vpop.trf.xlu0
    %v315 = vpop.trf.xlu0
    %v316 = vpop.trf.xlu0
    %v317 = vpop.trf.xlu0
    %v318 = vpop.trf.xlu0
    %v319 = vpop.trf.xlu0
    %v320 = vpop.trf.xlu0
    %v321 = vpop.trf.xlu0
    %v322 = vpop.trf.xlu0
    %v323 = vpop.trf.xlu0
    %v324 = vpop.trf.xlu0
    %v326 = vsel %vm196, %v309, 0
    %v329 = vsel %vm196, %v310, 0
    %v332 = vsel %vm196, %v311, 0
    %v335 = vsel %vm196, %v312, 0
    %v338 = vsel %vm196, %v313, 0
    %v341 = vsel %vm196, %v314, 0
    %v344 = vsel %vm196, %v315, 0
    %v347 = vsel %vm196, %v316, 0
    %349 = vmatprep.subr.mxu0 %v288
    %350 = vmatpush1.msra.mxu0 %v287
    %351 = vmatprep.subr.mxu0 %v290
    %352 = vmatpush1.msra.mxu0 %v289
    %353 = vmatprep.subr.mxu0 0.0
    %354 = vmatpush1.msra.mxu0 0.0
    %355 = vmatprep.subr.mxu0 0.0
    %356 = vmatpush1.msra.mxu0 0.0
    %357 = vmatprep.subr.mxu0 0.0
    %358 = vmatpush1.msra.mxu0 0.0
    %359 = vmatprep.subr.mxu0 0.0
    %360 = vmatpush1.msra.mxu0 0.0
    %361 = vmatprep.subr.mxu0 0.0
    %362 = vmatpush1.msra.mxu0 0.0
    %363 = vmatprep.subr.mxu0 0.0
    %364 = vmatpush1.msra.mxu0 0.0
    %365 = vmatprep.subr.mxu0 0.0
    %366 = vmatpush1.msra.mxu0 0.0
    %367 = vmatprep.subr.mxu0 0.0
    %368 = vmatpush1.msra.mxu0 0.0
    %369 = vmatprep.subr.mxu0 0.0
    %370 = vmatpush1.msra.mxu0 0.0
    %371 = vmatprep.subr.mxu0 0.0
    %372 = vmatpush1.msra.mxu0 0.0
    %373 = vmatprep.subr.mxu0 0.0
    %374 = vmatpush1.msra.mxu0 0.0
    %375 = vmatprep.subr.mxu0 0.0
    %376 = vmatpush1.msra.mxu0 0.0
    %377 = vmatprep.subr.mxu0 0.0
    %378 = vmatpush1.msra.mxu0 0.0
    %379 = vmatprep.subr.mxu0 0.0
    %380 = vmatpush1.msra.mxu0 0.0
    %381 = vmatprep.subr.mxu0 0.0
    %382 = vmatpush1.msra.mxu0 0.0
    %383 = vmatprep.subr.mxu0 0.0
    %384 = vmatpush1.msra.mxu0 0.0
    %385 = vmatprep.subr.mxu0 0.0
    %386 = vmatpush1.msra.mxu0 0.0
    %387 = vmatprep.subr.mxu0 0.0
    %388 = vmatpush1.msra.mxu0 0.0
    %389 = vmatprep.subr.mxu0 0.0
    %390 = vmatpush1.msra.mxu0 0.0
    %391 = vmatprep.subr.mxu0 0.0
    %392 = vmatpush1.msra.mxu0 0.0
    %393 = vmatprep.subr.mxu0 0.0
    %394 = vmatpush1.msra.mxu0 0.0
    %395 = vmatprep.subr.mxu0 0.0
    %396 = vmatpush1.msra.mxu0 0.0
    %397 = vmatprep.subr.mxu0 0.0
    %398 = vmatpush1.msra.mxu0 0.0
    %399 = vmatprep.subr.mxu0 0.0
    %400 = vmatpush1.msra.mxu0 0.0
    %401 = vmatprep.subr.mxu0 0.0
    %402 = vmatpush1.msra.mxu0 0.0
    %403 = vmatprep.subr.mxu0 0.0
    %404 = vmatpush1.msra.mxu0 0.0
    %405 = vmatprep.subr.mxu0 0.0
    %406 = vmatpush1.msra.mxu0 0.0
    %407 = vmatprep.subr.mxu0 0.0
    %408 = vmatpush1.msra.mxu0 0.0
    %409 = vmatprep.subr.mxu0 0.0
    %410 = vmatpush1.msra.mxu0 0.0
    %411 = vmatprep.subr.mxu0 0.0
    %412 = vmatpush1.msra.mxu0 0.0
    %413 = vmatprep.mubr.f32.mxu0 0.0
    %414 = vmatmul.mubr.f32.gmra.mrb[0].mxu0 %v326
    %v415 = vpop.f32.mrb[0].mxu0
    %v416 = vadd.f32 0.0, %v415
    %v417 = vpop.f32.mrb[0].mxu0
    %v418 = vadd.f32 0.0, %v417
    %419 = vmatprep.mubr.f32.mxu0 0.0
    %420 = vmatmul.mubr.f32.gmra.mrb[0].mxu0 %v329
    %v421 = vpop.f32.mrb[0].mxu0
    %v422 = vadd.f32 0.0, %v421
    %v423 = vpop.f32.mrb[0].mxu0
    %v424 = vadd.f32 0.0, %v423
    %425 = vmatprep.mubr.f32.mxu0 0.0
    %426 = vmatmul.mubr.f32.gmra.mrb[0].mxu0 %v332
    %v427 = vpop.f32.mrb[0].mxu0
    %v428 = vadd.f32 0.0, %v427
    %v429 = vpop.f32.mrb[0].mxu0
    %v430 = vadd.f32 0.0, %v429
    %431 = vmatprep.mubr.f32.mxu0 0.0
    %432 = vmatmul.mubr.f32.gmra.mrb[0].mxu0 %v335
    %v433 = vpop.f32.mrb[0].mxu0
    %v434 = vadd.f32 0.0, %v433
    %v435 = vpop.f32.mrb[0].mxu0
    %v436 = vadd.f32 0.0, %v435
    %437 = vmatprep.mubr.f32.mxu0 0.0
    %438 = vmatmul.mubr.f32.gmra.mrb[0].mxu0 %v338
    %v439 = vpop.f32.mrb[0].mxu0
    %v440 = vadd.f32 0.0, %v439
    %v441 = vpop.f32.mrb[0].mxu0
    %v442 = vadd.f32 0.0, %v441
    %443 = vmatprep.mubr.f32.mxu0 0.0
    %444 = vmatmul.mubr.f32.gmra.mrb[0].mxu0 %v341
    %v445 = vpop.f32.mrb[0].mxu0
    %v446 = vadd.f32 0.0, %v445
    %v447 = vpop.f32.mrb[0].mxu0
    %v448 = vadd.f32 0.0, %v447
    %449 = vmatprep.mubr.f32.mxu0 0.0
    %450 = vmatmul.mubr.f32.gmra.mrb[0].mxu0 %v344
    %v451 = vpop.f32.mrb[0].mxu0
    %v452 = vadd.f32 0.0, %v451
    %v453 = vpop.f32.mrb[0].mxu0
    %v454 = vadd.f32 0.0, %v453
    %455 = vmatprep.mubr.f32.mxu0 0.0
    %456 = vmatmul.mubr.f32.gmra.mrb[0].mxu0 %v347
    %v457 = vpop.f32.mrb[0].mxu0
    %v458 = vadd.f32 0.0, %v457
    %v459 = vpop.f32.mrb[0].mxu0
    %v460 = vadd.f32 0.0, %v459
    %461 = vdwg.mxu0
    %462 = vst [vmem:[#allocation2] sm:$0xff] %v251
    %463 = vst [vmem:[#allocation2 + $0x8] sm:$0xff] %v251
    %464 = vst [vmem:[#allocation2 + $0x10] sm:$0xff] %v252
    %465 = vst [vmem:[#allocation2 + $0x18] sm:$0xff] %v252
    %466 = vst [vmem:[#allocation2 + $0x20] sm:$0xff] %v253
    %467 = vst [vmem:[#allocation2 + $0x28] sm:$0xff] %v253
    %468 = vst [vmem:[#allocation2 + $0x30] sm:$0xff] %v254
    %469 = vst [vmem:[#allocation2 + $0x38] sm:$0xff] %v254
    %470 = vst [vmem:[#allocation2 + $0x40] sm:$0xff] %v255
    %471 = vst [vmem:[#allocation2 + $0x48] sm:$0xff] %v255
    %472 = vst [vmem:[#allocation2 + $0x50] sm:$0xff] %v256
    %473 = vst [vmem:[#allocation2 + $0x58] sm:$0xff] %v256
    %474 = vst [vmem:[#allocation2 + $0x60] sm:$0xff] %v257
    %475 = vst [vmem:[#allocation2 + $0x68] sm:$0xff] %v257
    %476 = vst [vmem:[#allocation2 + $0x70] sm:$0xff] %v258
    %477 = vst [vmem:[#allocation2 + $0x78] sm:$0xff] %v258
    %478 = vst [vmem:[#allocation2 + $0x80] sm:$0xff] %v416
    %479 = vst [vmem:[#allocation2 + $0x88] sm:$0xff] %v418
    %480 = vst [vmem:[#allocation2 + $0x90] sm:$0xff] %v422
    %481 = vst [vmem:[#allocation2 + $0x98] sm:$0xff] %v424
    %482 = vst [vmem:[#allocation2 + $0xa0] sm:$0xff] %v428
    %483 = vst [vmem:[#allocation2 + $0xa8] sm:$0xff] %v430
    %484 = vst [vmem:[#allocation2 + $0xb0] sm:$0xff] %v434
    %485 = vst [vmem:[#allocation2 + $0xb8] sm:$0xff] %v436
    %486 = vst [vmem:[#allocation2 + $0xc0] sm:$0xff] %v440
    %487 = vst [vmem:[#allocation2 + $0xc8] sm:$0xff] %v442
    %488 = vst [vmem:[#allocation2 + $0xd0] sm:$0xff] %v446
    %489 = vst [vmem:[#allocation2 + $0xd8] sm:$0xff] %v448
    %490 = vst [vmem:[#allocation2 + $0xe0] sm:$0xff] %v452
    %491 = vst [vmem:[#allocation2 + $0xe8] sm:$0xff] %v454
    %492 = vst [vmem:[#allocation2 + $0xf0] sm:$0xff] %v458
    %493 = vst [vmem:[#allocation2 + $0xf8] sm:$0xff] %v460
    // Predicated region
    $region10: #{tpu_custom_call.1} parent=1 // pred_check
      _
    $region11: #{tpu_custom_call.1} parent=1 // pred_check_branch
      %495 = sbr.rel (0) target = $region13
    $region12: #{tpu_custom_call.1} parent=1 // pred_region
      %s497 = ssub.s32 4096, 4096
      %498 = vsyncadd [#allocation3], %s497
      %s499 = sshll.u32 [#allocation2], 4
      %s500 = int_to_ptr.vmem [resolvable:$true] %s499
      %505 = dma.vmem_to_hbm [thread:$0]  %s500, 4096, %s2, [#allocation3], 256, 256, 16
    $region13: #{tpu_custom_call.1} parent=1 // pred_fallthru
      _
    // Predicated region
    $region14: #{tpu_custom_call.1} parent=1 // pred_check
      _
    $region15: #{tpu_custom_call.1} parent=1 // pred_check_branch
      %507 = sbr.rel (0) target = $region17
    $region16: #{tpu_custom_call.1} parent=1 // pred_region
      %508 = dma.done [#allocation3], 4096
    $region17: #{tpu_custom_call.1} parent=1 // pred_fallthru
      _
    %509 = vsyncpa [#allocation3], 1

</llo_original>
